<compile_context>
chip_gen: v6e
topology: v6e:2x2x1
jax: 0.10.0
libtpu: 0.0.40
codegen_flags: <defaults>
</compile_context>

<pallas_src>
import functools

import jax
import jax.numpy as jnp
import numpy as np
from jax.experimental import pallas as pl
from jax.experimental.pallas import tpu as pltpu

EPS = 1e-5
LANE = 128  # pad the action dim to a lane-dense multiple of 128


def _bn_train_fused(h, gamma, beta):
    """Training-mode BatchNorm1d (biased variance, eps=1e-5) as a fused scale/shift."""
    mean = jnp.mean(h, axis=0, keepdims=True)          # [1, F]
    c = h - mean
    var = jnp.mean(c * c, axis=0, keepdims=True)       # biased variance, [1, F]
    scale = gamma * jax.lax.rsqrt(var + EPS)            # [1, F]
    shift = beta - mean * scale                         # [1, F]
    return h * scale + shift                            # one broadcast FMA over [B, F]


def dqn_kernel(x_ref,
               w1_ref, g1_ref, be1_ref,
               w2_ref, g2_ref, be2_ref,
               w3_ref, b3_ref,
               out_ref, *, matmul_dtype):
    def mm(a, w_ref):
        # MXU matmul; operands optionally cast to bf16 (v6e/v7x fast path),
        # accumulation always in f32.
        return jnp.dot(a.astype(matmul_dtype), w_ref[...].astype(matmul_dtype),
                       preferred_element_type=jnp.float32)

    x = x_ref[...]

    # Linear(state_length, 128) -- bias omitted: cancelled by training-mode BN.
    h = mm(x, w1_ref)
    h = _bn_train_fused(h, g1_ref[...], be1_ref[...])

    # Linear(128, 256) -- bias omitted: cancelled by training-mode BN.
    h = mm(h, w2_ref)
    h = _bn_train_fused(h, g2_ref[...], be2_ref[...])

    # Linear(256, action_length) padded out to 128 lanes (lane-dense store).
    out = mm(h, w3_ref) + b3_ref[...]
    out_ref[...] = out.astype(out_ref.dtype)


def dqn_forward(x, params, *, matmul_dtype=jnp.float32):
    """x: [B, state_length] f32. params: dict from init_params (w3/b3 lane-padded)."""
    B = x.shape[0]
    n_pad = params["w3"].shape[1]                 # padded (lane-dense) action dim
    action_length = int(params["action_length"])
    vmem = pl.BlockSpec(memory_space=pltpu.MemorySpace.VMEM)
    kernel = functools.partial(dqn_kernel, matmul_dtype=matmul_dtype)
    out_padded = pl.pallas_call(
        kernel,
        out_shape=jax.ShapeDtypeStruct((B, n_pad), jnp.float32),
        in_specs=[vmem] * 9,
        out_specs=vmem,
    )(x,
      params["w1"], params["g1"], params["be1"],
      params["w2"], params["g2"], params["be2"],
      params["w3"], params["b3"])
    return out_padded[:, :action_length]


def init_params(key, state_length, action_length):
    """Deterministic init mirroring PyTorch defaults: Linear -> uniform(+/-1/sqrt(fan_in)),
    BatchNorm -> gamma=1, beta=0. w3/b3 are zero-padded to a lane-dense width."""
    ks = jax.random.split(key, 6)

    def lin(kw, kb, fan_in, fan_out):
        bound = 1.0 / np.sqrt(fan_in)
        w = jax.random.uniform(kw, (fan_in, fan_out), jnp.float32, -bound, bound)
        b = jax.random.uniform(kb, (1, fan_out), jnp.float32, -bound, bound)
        return w, b

    w1, b1 = lin(ks[0], ks[1], state_length, 128)
    w2, b2 = lin(ks[2], ks[3], 128, 256)
    w3, b3 = lin(ks[4], ks[5], 256, action_length)

    # Lane-dense padding of the action dim (zero columns -> identical math).
    n_pad = max(LANE, ((action_length + LANE - 1) // LANE) * LANE)
    w3_p = jnp.zeros((256, n_pad), jnp.float32).at[:, :action_length].set(w3)
    b3_p = jnp.zeros((1, n_pad), jnp.float32).at[:, :action_length].set(b3)

    return dict(
        w1=w1, b1=b1,
        g1=jnp.ones((1, 128), jnp.float32), be1=jnp.zeros((1, 128), jnp.float32),
        w2=w2, b2=b2,
        g2=jnp.ones((1, 256), jnp.float32), be2=jnp.zeros((1, 256), jnp.float32),
        w3=w3_p, b3=b3_p,
        action_length=action_length,
    )


def _bn_ref(h, gamma, beta):
    mean = jnp.mean(h, axis=0, keepdims=True)
    var = jnp.mean((h - mean) * (h - mean), axis=0, keepdims=True)
    return gamma * (h - mean) * jax.lax.rsqrt(var + EPS) + beta


def dqn_reference(x, p):
    """Pure-JAX reference of the PyTorch module (training-mode BN, including the
    b1/b2 biases that BN mathematically cancels)."""
    a = int(p["action_length"])
    h = x @ p["w1"] + p["b1"]
    h = _bn_ref(h, p["g1"], p["be1"])
    h = h @ p["w2"] + p["b2"]
    h = _bn_ref(h, p["g2"], p["be2"])
    return (h @ p["w3"] + p["b3"])[:, :a]


if __name__ == "__main__":
    key = jax.random.PRNGKey(0)
    k_x, k_p = jax.random.split(key)

    batch = 8
    state_length = 32
    action_length = 4

    x = jax.random.normal(k_x, (batch, state_length), jnp.float32)
    params = init_params(k_p, state_length, action_length)

    out = dqn_forward(x, params)            # f32 matmuls: exact module semantics
    out = jax.block_until_ready(out)

    ref = dqn_reference(x, params)
    np.testing.assert_allclose(np.asarray(out), np.asarray(ref), rtol=1e-4, atol=1e-4)

    print("KERNEL_OK")
</pallas_src>

<mosaic_0001>
module attributes {stable_mosaic.version = 11 : i64} {
  func.func @dqn_kernel(%arg0: memref<8x32xf32, #tpu.memory_space<vmem>>, %arg1: memref<32x128xf32, #tpu.memory_space<vmem>>, %arg2: memref<1x128xf32, #tpu.memory_space<vmem>>, %arg3: memref<1x128xf32, #tpu.memory_space<vmem>>, %arg4: memref<128x256xf32, #tpu.memory_space<vmem>>, %arg5: memref<1x256xf32, #tpu.memory_space<vmem>>, %arg6: memref<1x256xf32, #tpu.memory_space<vmem>>, %arg7: memref<256x128xf32, #tpu.memory_space<vmem>>, %arg8: memref<1x128xf32, #tpu.memory_space<vmem>>, %arg9: memref<8x128xf32, #tpu.memory_space<vmem>>) attributes {dimension_semantics = [], scalar_prefetch = 0 : i64, scratch_operands = 0 : i64, tpu.core_type = #tpu.core_type<tc>} {
    %c0 = arith.constant 0 : index
    %c0_0 = arith.constant 0 : index
    %0 = vector.load %arg0[%c0, %c0_0] : memref<8x32xf32, #tpu.memory_space<vmem>>, vector<8x32xf32>
    %c0_1 = arith.constant 0 : index
    %c0_2 = arith.constant 0 : index
    %1 = vector.load %arg1[%c0_1, %c0_2] : memref<32x128xf32, #tpu.memory_space<vmem>>, vector<32x128xf32>
    %cst = arith.constant dense<0.000000e+00> : vector<8x128xf32>
    %2 = tpu.matmul %0, %1, %cst {dimension_numbers = #tpu.dot_dimension_numbers<[1], [0], [0], [1], [0, 0, 1, 1], [], []>} : vector<8x32xf32>, vector<32x128xf32>, vector<8x128xf32> -> vector<8x128xf32>
    %c0_3 = arith.constant 0 : index
    %c0_4 = arith.constant 0 : index
    %3 = vector.load %arg2[%c0_3, %c0_4] : memref<1x128xf32, #tpu.memory_space<vmem>>, vector<1x128xf32>
    %c0_5 = arith.constant 0 : index
    %c0_6 = arith.constant 0 : index
    %4 = vector.load %arg3[%c0_5, %c0_6] : memref<1x128xf32, #tpu.memory_space<vmem>>, vector<1x128xf32>
    %cst_7 = arith.constant dense<0.000000e+00> : vector<128xf32>
    %5 = vector.multi_reduction <add>, %2, %cst_7 [0] : vector<8x128xf32> to vector<128xf32>
    %6 = vector.shape_cast %5 : vector<128xf32> to vector<1x128xf32>
    %cst_8 = arith.constant 8.000000e+00 : f32
    %7 = vector.broadcast %cst_8 : f32 to vector<1x128xf32>
    %8 = arith.divf %6, %7 : vector<1x128xf32>
    %9 = vector.broadcast %8 : vector<1x128xf32> to vector<8x128xf32>
    %10 = arith.subf %2, %9 : vector<8x128xf32>
    %11 = arith.mulf %10, %10 : vector<8x128xf32>
    %cst_9 = arith.constant dense<0.000000e+00> : vector<128xf32>
    %12 = vector.multi_reduction <add>, %11, %cst_9 [0] : vector<8x128xf32> to vector<128xf32>
    %13 = vector.shape_cast %12 : vector<128xf32> to vector<1x128xf32>
    %cst_10 = arith.constant 8.000000e+00 : f32
    %14 = vector.broadcast %cst_10 : f32 to vector<1x128xf32>
    %15 = arith.divf %13, %14 : vector<1x128xf32>
    %cst_11 = arith.constant 9.99999974E-6 : f32
    %16 = vector.broadcast %cst_11 : f32 to vector<1x128xf32>
    %17 = arith.addf %15, %16 : vector<1x128xf32>
    %18 = math.rsqrt %17 : vector<1x128xf32>
    %19 = arith.mulf %3, %18 : vector<1x128xf32>
    %20 = arith.mulf %8, %19 : vector<1x128xf32>
    %21 = arith.subf %4, %20 : vector<1x128xf32>
    %22 = vector.broadcast %19 : vector<1x128xf32> to vector<8x128xf32>
    %23 = arith.mulf %2, %22 : vector<8x128xf32>
    %24 = vector.broadcast %21 : vector<1x128xf32> to vector<8x128xf32>
    %25 = arith.addf %23, %24 : vector<8x128xf32>
    %c0_12 = arith.constant 0 : index
    %c0_13 = arith.constant 0 : index
    %26 = vector.load %arg4[%c0_12, %c0_13] : memref<128x256xf32, #tpu.memory_space<vmem>>, vector<128x256xf32>
    %cst_14 = arith.constant dense<0.000000e+00> : vector<8x256xf32>
    %27 = tpu.matmul %25, %26, %cst_14 {dimension_numbers = #tpu.dot_dimension_numbers<[1], [0], [0], [1], [0, 0, 1, 1], [], []>} : vector<8x128xf32>, vector<128x256xf32>, vector<8x256xf32> -> vector<8x256xf32>
    %c0_15 = arith.constant 0 : index
    %c0_16 = arith.constant 0 : index
    %28 = vector.load %arg5[%c0_15, %c0_16] : memref<1x256xf32, #tpu.memory_space<vmem>>, vector<1x256xf32>
    %c0_17 = arith.constant 0 : index
    %c0_18 = arith.constant 0 : index
    %29 = vector.load %arg6[%c0_17, %c0_18] : memref<1x256xf32, #tpu.memory_space<vmem>>, vector<1x256xf32>
    %cst_19 = arith.constant dense<0.000000e+00> : vector<256xf32>
    %30 = vector.multi_reduction <add>, %27, %cst_19 [0] : vector<8x256xf32> to vector<256xf32>
    %31 = vector.shape_cast %30 : vector<256xf32> to vector<1x256xf32>
    %cst_20 = arith.constant 8.000000e+00 : f32
    %32 = vector.broadcast %cst_20 : f32 to vector<1x256xf32>
    %33 = arith.divf %31, %32 : vector<1x256xf32>
    %34 = vector.broadcast %33 : vector<1x256xf32> to vector<8x256xf32>
    %35 = arith.subf %27, %34 : vector<8x256xf32>
    %36 = arith.mulf %35, %35 : vector<8x256xf32>
    %cst_21 = arith.constant dense<0.000000e+00> : vector<256xf32>
    %37 = vector.multi_reduction <add>, %36, %cst_21 [0] : vector<8x256xf32> to vector<256xf32>
    %38 = vector.shape_cast %37 : vector<256xf32> to vector<1x256xf32>
    %cst_22 = arith.constant 8.000000e+00 : f32
    %39 = vector.broadcast %cst_22 : f32 to vector<1x256xf32>
    %40 = arith.divf %38, %39 : vector<1x256xf32>
    %cst_23 = arith.constant 9.99999974E-6 : f32
    %41 = vector.broadcast %cst_23 : f32 to vector<1x256xf32>
    %42 = arith.addf %40, %41 : vector<1x256xf32>
    %43 = math.rsqrt %42 : vector<1x256xf32>
    %44 = arith.mulf %28, %43 : vector<1x256xf32>
    %45 = arith.mulf %33, %44 : vector<1x256xf32>
    %46 = arith.subf %29, %45 : vector<1x256xf32>
    %47 = vector.broadcast %44 : vector<1x256xf32> to vector<8x256xf32>
    %48 = arith.mulf %27, %47 : vector<8x256xf32>
    %49 = vector.broadcast %46 : vector<1x256xf32> to vector<8x256xf32>
    %50 = arith.addf %48, %49 : vector<8x256xf32>
    %c0_24 = arith.constant 0 : index
    %c0_25 = arith.constant 0 : index
    %51 = vector.load %arg7[%c0_24, %c0_25] : memref<256x128xf32, #tpu.memory_space<vmem>>, vector<256x128xf32>
    %cst_26 = arith.constant dense<0.000000e+00> : vector<8x128xf32>
    %52 = tpu.matmul %50, %51, %cst_26 {dimension_numbers = #tpu.dot_dimension_numbers<[1], [0], [0], [1], [0, 0, 1, 1], [], []>} : vector<8x256xf32>, vector<256x128xf32>, vector<8x128xf32> -> vector<8x128xf32>
    %c0_27 = arith.constant 0 : index
    %c0_28 = arith.constant 0 : index
    %53 = vector.load %arg8[%c0_27, %c0_28] : memref<1x128xf32, #tpu.memory_space<vmem>>, vector<1x128xf32>
    %54 = vector.broadcast %53 : vector<1x128xf32> to vector<8x128xf32>
    %55 = arith.addf %52, %54 : vector<8x128xf32>
    %c0_29 = arith.constant 0 : index
    %c0_30 = arith.constant 0 : index
    %56 = vector.load %arg9[%c0_29, %c0_30] : memref<8x128xf32, #tpu.memory_space<vmem>>, vector<8x128xf32>
    tpu.vector_store %arg9[%c0_29, %c0_30], %55 {strides = array<i32>} : memref<8x128xf32, #tpu.memory_space<vmem>>, vector<8x128xf32>,
    return
  }
}

</mosaic_0001>

<llo_original>
// kernel: tpu_custom_call.1
$region0: #{tpu_custom_call.1}
  #allocation0 [shape = 'u32[]', space=smem, size = 0x4, offset = 0x4, fixed_abs, tag = 'smem constant byte address 0x4 - core index']
  #allocation1 [shape = 'u32[144,128]{1,0:T(1,128)}', space=vmem, size = 0x12000, scoped, tag = 'internal scratch']
  %s0 = inlined_call_operand.hbm [shape: f32[8,32], index: 0, kind: input, shape index: {}]
  %s1 = inlined_call_operand.hbm [shape: f32[32,128], index: 1, kind: input, shape index: {}]
  %s2 = inlined_call_operand.vmem [shape: f32[1,128], index: 2, kind: input, shape index: {}]
  %s3 = inlined_call_operand.hbm [shape: f32[1,128], index: 3, kind: input, shape index: {}]
  %s4 = inlined_call_operand.hbm [shape: f32[128,256], index: 4, kind: input, shape index: {}]
  %s5 = inlined_call_operand.vmem [shape: f32[1,256], index: 5, kind: input, shape index: {}]
  %s6 = inlined_call_operand.vmem [shape: f32[1,256], index: 6, kind: input, shape index: {}]
  %s7 = inlined_call_operand.hbm [shape: f32[256,128], index: 7, kind: input, shape index: {}]
  %s8 = inlined_call_operand.vmem [shape: f32[1,128], index: 8, kind: input, shape index: {}]
  %s9 = inlined_call_operand.hbm [shape: f32[8,128], index: 9, kind: output, shape index: {}]
  %s10 = sld [smem:[#allocation0]]
  $region66: #{tpu_custom_call.1} parent=0
    _
  %s12 = ssub.s32 1, %s10
  %s13 = scalar_select 0, %s12, %s10
  $region1: #{tpu_custom_call.1} parent=0
    #allocation2 [shape = 'u8[4096]{0}', space=vmem, size = 0x1000, scoped, tag = 'input window, operand 0, single buffered']
    #allocation3 [shape = 's32[1]{0}', space=sflag, size = 0x4, scoped, tag = 'scoped memory for tpu_custom_call.1']
    #allocation4 [shape = 's32[1]{0}', space=sflag, size = 0x4, scoped, tag = 'scoped memory for tpu_custom_call.1']
    #allocation5 [shape = 'u8[16384]{0}', space=vmem, size = 0x4000, scoped, tag = 'input window, operand 1, single buffered']
    #allocation6 [shape = 's32[1]{0}', space=sflag, size = 0x4, scoped, tag = 'scoped memory for tpu_custom_call.1']
    #allocation7 [shape = 'u8[512]{0}', space=vmem, size = 0x400, scoped, tag = 'input window, operand 3, single buffered']
    #allocation8 [shape = 'u8[131072]{0}', space=vmem, size = 0x20000, scoped, tag = 'input window, operand 4, single buffered']
    #allocation9 [shape = 's32[1]{0}', space=sflag, size = 0x4, scoped, tag = 'scoped memory for tpu_custom_call.1']
    #allocation10 [shape = 'u8[131072]{0}', space=vmem, size = 0x20000, scoped, tag = 'input window, operand 7, single buffered']
    #allocation11 [shape = 'u8[4096]{0}', space=vmem, size = 0x1000, scoped, tag = 'output window, operand 0, single buffered']
    %14 = vsyncpa [#allocation3], 0
    %15 = vsyncpa [#allocation6], 0
    %16 = vsyncpa [#allocation9], 0
    %17 = vsyncpa [#allocation4], 0
    // Predicated region
    $region2: #{tpu_custom_call.1} parent=1 // pred_check
      _
    $region3: #{tpu_custom_call.1} parent=1 // pred_check_branch
      %19 = sbr.rel (0) target = $region5
    $region4: #{tpu_custom_call.1} parent=1 // pred_region
      %s21 = ssub.s32 128, 128
      %22 = vsyncadd [#allocation3], %s21
      %s24 = sshll.u32 [#allocation2], 4
      %s25 = int_to_ptr.vmem [resolvable:$true] %s24
      %27 = dma.hbm_to_vmem [thread:$0]  %s0, 128, %s25, [#allocation3]
    $region5: #{tpu_custom_call.1} parent=1 // pred_fallthru
      _
    // Predicated region
    $region6: #{tpu_custom_call.1} parent=1 // pred_check
      _
    $region7: #{tpu_custom_call.1} parent=1 // pred_check_branch
      %29 = sbr.rel (0) target = $region9
    $region8: #{tpu_custom_call.1} parent=1 // pred_region
      %s31 = ssub.s32 512, 512
      %32 = vsyncadd [#allocation6], %s31
      %s33 = sshll.u32 [#allocation5], 4
      %s34 = int_to_ptr.vmem [resolvable:$true] %s33
      %39 = dma.hbm_to_vmem [thread:$0]  %s1, 512, %s34, [#allocation6], 128, 128, 8
    $region9: #{tpu_custom_call.1} parent=1 // pred_fallthru
      _
    // Predicated region
    $region10: #{tpu_custom_call.1} parent=1 // pred_check
      _
    $region11: #{tpu_custom_call.1} parent=1 // pred_check_branch
      %41 = sbr.rel (0) target = $region13
    $region12: #{tpu_custom_call.1} parent=1 // pred_region
      _
    $region13: #{tpu_custom_call.1} parent=1 // pred_fallthru
      _
    // Predicated region
    $region14: #{tpu_custom_call.1} parent=1 // pred_check
      _
    $region15: #{tpu_custom_call.1} parent=1 // pred_check_branch
      %43 = sbr.rel (0) target = $region17
    $region16: #{tpu_custom_call.1} parent=1 // pred_region
      %s45 = ssub.s32 16, 16
      %46 = vsyncadd [#allocation6], %s45
      %s48 = sshll.u32 [#allocation7], 4
      %s49 = int_to_ptr.vmem [resolvable:$true] %s48
      %51 = dma.hbm_to_vmem [thread:$0]  %s3, 16, %s49, [#allocation6]
    $region17: #{tpu_custom_call.1} parent=1 // pred_fallthru
      _
    // Predicated region
    $region18: #{tpu_custom_call.1} parent=1 // pred_check
      _
    $region19: #{tpu_custom_call.1} parent=1 // pred_check_branch
      %53 = sbr.rel (0) target = $region21
    $region20: #{tpu_custom_call.1} parent=1 // pred_region
      %s55 = ssub.s32 4096, 4096
      %56 = vsyncadd [#allocation9], %s55
      %s57 = sshll.u32 [#allocation8], 4
      %s58 = int_to_ptr.vmem [resolvable:$true] %s57
      %63 = dma.hbm_to_vmem [thread:$0]  %s4, 4096, %s58, [#allocation9], 256, 256, 16
    $region21: #{tpu_custom_call.1} parent=1 // pred_fallthru
      _
    // Predicated region
    $region22: #{tpu_custom_call.1} parent=1 // pred_check
      _
    $region23: #{tpu_custom_call.1} parent=1 // pred_check_branch
      %65 = sbr.rel (0) target = $region25
    $region24: #{tpu_custom_call.1} parent=1 // pred_region
      _
    $region25: #{tpu_custom_call.1} parent=1 // pred_fallthru
      _
    // Predicated region
    $region26: #{tpu_custom_call.1} parent=1 // pred_check
      _
    $region27: #{tpu_custom_call.1} parent=1 // pred_check_branch
      %67 = sbr.rel (0) target = $region29
    $region28: #{tpu_custom_call.1} parent=1 // pred_region
      _
    $region29: #{tpu_custom_call.1} parent=1 // pred_fallthru
      _
    // Predicated region
    $region30: #{tpu_custom_call.1} parent=1 // pred_check
      _
    $region31: #{tpu_custom_call.1} parent=1 // pred_check_branch
      %69 = sbr.rel (0) target = $region33
    $region32: #{tpu_custom_call.1} parent=1 // pred_region
      %s71 = ssub.s32 4096, 4096
      %72 = vsyncadd [#allocation9], %s71
      %s73 = sshll.u32 [#allocation10], 4
      %s74 = int_to_ptr.vmem [resolvable:$true] %s73
      %79 = dma.hbm_to_vmem [thread:$0]  %s7, 4096, %s74, [#allocation9], 128, 128, 8
    $region33: #{tpu_custom_call.1} parent=1 // pred_fallthru
      _
    // Predicated region
    $region34: #{tpu_custom_call.1} parent=1 // pred_check
      _
    $region35: #{tpu_custom_call.1} parent=1 // pred_check_branch
      %81 = sbr.rel (0) target = $region37
    $region36: #{tpu_custom_call.1} parent=1 // pred_region
      _
    $region37: #{tpu_custom_call.1} parent=1 // pred_fallthru
      _
    // Predicated region
    $region38: #{tpu_custom_call.1} parent=1 // pred_check
      _
    $region39: #{tpu_custom_call.1} parent=1 // pred_check_branch
      %83 = sbr.rel (0) target = $region41
    $region40: #{tpu_custom_call.1} parent=1 // pred_region
      %84 = dma.done [#allocation3], 128
    $region41: #{tpu_custom_call.1} parent=1 // pred_fallthru
      _
    // Predicated region
    $region42: #{tpu_custom_call.1} parent=1 // pred_check
      _
    $region43: #{tpu_custom_call.1} parent=1 // pred_check_branch
      %86 = sbr.rel (0) target = $region45
    $region44: #{tpu_custom_call.1} parent=1 // pred_region
      %87 = dma.done [#allocation6], 512
    $region45: #{tpu_custom_call.1} parent=1 // pred_fallthru
      _
    // Predicated region
    $region46: #{tpu_custom_call.1} parent=1 // pred_check
      _
    $region47: #{tpu_custom_call.1} parent=1 // pred_check_branch
      %89 = sbr.rel (0) target = $region49
    $region48: #{tpu_custom_call.1} parent=1 // pred_region
      %90 = dma.done [#allocation6], 16
    $region49: #{tpu_custom_call.1} parent=1 // pred_fallthru
      _
    // Predicated region
    $region50: #{tpu_custom_call.1} parent=1 // pred_check
      _
    $region51: #{tpu_custom_call.1} parent=1 // pred_check_branch
      %92 = sbr.rel (0) target = $region53
    $region52: #{tpu_custom_call.1} parent=1 // pred_region
      %93 = dma.done [#allocation9], 4096
    $region53: #{tpu_custom_call.1} parent=1 // pred_fallthru
      _
    // Predicated region
    $region54: #{tpu_custom_call.1} parent=1 // pred_check
      _
    $region55: #{tpu_custom_call.1} parent=1 // pred_check_branch
      %95 = sbr.rel (0) target = $region57
    $region56: #{tpu_custom_call.1} parent=1 // pred_region
      %96 = dma.done [#allocation9], 4096
    $region57: #{tpu_custom_call.1} parent=1 // pred_fallthru
      _
    %v97 = vld [vmem:[#allocation2] sm:$0xff]
    %v98 = vld [vmem:[#allocation5] sm:$0xff]
    %v99 = vld [vmem:[#allocation5 + $0x8] sm:$0xff]
    %v100 = vld [vmem:[#allocation5 + $0x10] sm:$0xff]
    %v101 = vld [vmem:[#allocation5 + $0x18] sm:$0xff]
    %vm102 = vcmask 261120
    %v104 = vsel %vm102, %v97, 0
    %106 = vmatprep.subr.mxu0 0.0
    %107 = vmatpush1.msra.mxu0 0.0
    %108 = vmatprep.subr.mxu0 0.0
    %109 = vmatpush1.msra.mxu0 0.0
    %110 = vmatprep.subr.mxu0 0.0
    %111 = vmatpush1.msra.mxu0 0.0
    %112 = vmatprep.subr.mxu0 0.0
    %113 = vmatpush1.msra.mxu0 0.0
    %114 = vmatprep.subr.mxu0 0.0
    %115 = vmatpush1.msra.mxu0 0.0
    %116 = vmatprep.subr.mxu0 0.0
    %117 = vmatpush1.msra.mxu0 0.0
    %118 = vmatprep.subr.mxu0 0.0
    %119 = vmatpush1.msra.mxu0 0.0
    %120 = vmatprep.subr.mxu0 0.0
    %121 = vmatpush1.msra.mxu0 0.0
    %122 = vmatprep.subr.mxu0 0.0
    %123 = vmatpush1.msra.mxu0 0.0
    %124 = vmatprep.subr.mxu0 0.0
    %125 = vmatpush1.msra.mxu0 0.0
    %126 = vmatprep.subr.mxu0 0.0
    %127 = vmatpush1.msra.mxu0 0.0
    %128 = vmatprep.subr.mxu0 0.0
    %129 = vmatpush1.msra.mxu0 0.0
    %130 = vmatprep.subr.mxu0 0.0
    %131 = vmatpush1.msra.mxu0 %v101
    %132 = vmatprep.subr.mxu0 0.0
    %133 = vmatpush1.msra.mxu0 %v100
    %134 = vmatprep.subr.mxu0 0.0
    %135 = vmatpush1.msra.mxu0 %v99
    %136 = vmatprep.subr.mxu0 0.0
    %137 = vmatpush1.msra.mxu0 %v98
    %138 = vmatprep.subr.mxu0 0.0
    %139 = vmatpush2.msra.mxu0 0.0
    %140 = vmatprep.subr.mxu0 0.0
    %141 = vmatpush2.msra.mxu0 0.0
    %142 = vmatprep.subr.mxu0 0.0
    %143 = vmatpush2.msra.mxu0 0.0
    %144 = vmatprep.subr.mxu0 0.0
    %145 = vmatpush2.msra.mxu0 0.0
    %146 = vmatprep.subr.mxu0 0.0
    %147 = vmatpush2.msra.mxu0 0.0
    %148 = vmatprep.subr.mxu0 0.0
    %149 = vmatpush2.msra.mxu0 0.0
    %150 = vmatprep.subr.mxu0 0.0
    %151 = vmatpush2.msra.mxu0 0.0
    %152 = vmatprep.subr.mxu0 0.0
    %153 = vmatpush2.msra.mxu0 0.0
    %154 = vmatprep.subr.mxu0 0.0
    %155 = vmatpush2.msra.mxu0 0.0
    %156 = vmatprep.subr.mxu0 0.0
    %157 = vmatpush2.msra.mxu0 0.0
    %158 = vmatprep.subr.mxu0 0.0
    %159 = vmatpush2.msra.mxu0 0.0
    %160 = vmatprep.subr.mxu0 0.0
    %161 = vmatpush2.msra.mxu0 0.0
    %162 = vmatprep.subr.mxu0 0.0
    %163 = vmatpush2.msra.mxu0 0.0
    %164 = vmatprep.subr.mxu0 0.0
    %165 = vmatpush2.msra.mxu0 0.0
    %166 = vmatprep.subr.mxu0 0.0
    %167 = vmatpush2.msra.mxu0 0.0
    %168 = vmatprep.subr.mxu0 0.0
    %169 = vmatpush2.msra.mxu0 0.0
    %170 = vmatprep.mubr.f32.mxu0 0.0
    %171 = vmatmul.mubr.f32.gmra.mxu0 %v104
    %v172 = vpop.f32.mrf.mxu0
    %v173 = vadd.f32 0.0, %v172
    %v174 = vpop.f32.mrf.mxu0
    %175 = vdwg.mxu0
    %v176 = vld [vmem:[%s2] sm:$0x1]
    %v177 = vld [vmem:[#allocation7] sm:$0x1]
    %v178 = vrot.slane %v173, 4
    %v179 = vadd.f32 %v173, %v178
    %v180 = vrot.slane %v179, 2
    %v181 = vadd.f32 %v179, %v180
    %v182 = vrot.slane %v181, 1
    %v183 = vadd.f32 %v181, %v182
    %v184 = vrcp.pop 8.0
    %v185 = vmul.f32 %v183, %v184
    %v186 = vsub.f32 %v173, %v185
    %v187 = vmul.f32 %v186, %v186
    %v188 = vrot.slane %v187, 4
    %v189 = vadd.f32 %v187, %v188
    %v190 = vrot.slane %v189, 2
    %v191 = vadd.f32 %v189, %v190
    %v192 = vrot.slane %v191, 1
    %v193 = vadd.f32 %v191, %v192
    %v194 = vmul.f32 %v193, %v184
    %v195 = vadd.f32 %v194, 1e-05
    %v196 = vrsqrt.pop %v195
    %v197 = vmul.f32 %v176, %v196
    %v198 = vmul.f32 %v185, %v197
    %v199 = vsub.f32 %v177, %v198
    %v201 = vlaneseq
    %v202 = vshrl.u32 %v201, 7
    %v203 = vsub.s32 0, %v202
    %v204 = vrot.slane %v197, %v203
    %v206 = vmul.f32 %v173, %v204
    %v208 = vlaneseq
    %v209 = vshrl.u32 %v208, 7
    %v210 = vsub.s32 0, %v209
    %v211 = vrot.slane %v199, %v210
    %v213 = vadd.f32 %v206, %v211
    %v214 = vld [vmem:[#allocation8] sm:$0xff]
    %v215 = vld [vmem:[#allocation8 + $0x8] sm:$0xff]
    %v216 = vld [vmem:[#allocation8 + $0x10] sm:$0xff]
    %v217 = vld [vmem:[#allocation8 + $0x18] sm:$0xff]
    %v218 = vld [vmem:[#allocation8 + $0x20] sm:$0xff]
    %v219 = vld [vmem:[#allocation8 + $0x28] sm:$0xff]
    %v220 = vld [vmem:[#allocation8 + $0x30] sm:$0xff]
    %v221 = vld [vmem:[#allocation8 + $0x38] sm:$0xff]
    %v222 = vld [vmem:[#allocation8 + $0x40] sm:$0xff]
    %v223 = vld [vmem:[#allocation8 + $0x48] sm:$0xff]
    %v224 = vld [vmem:[#allocation8 + $0x50] sm:$0xff]
    %v225 = vld [vmem:[#allocation8 + $0x58] sm:$0xff]
    %v226 = vld [vmem:[#allocation8 + $0x60] sm:$0xff]
    %v227 = vld [vmem:[#allocation8 + $0x68] sm:$0xff]
    %v228 = vld [vmem:[#allocation8 + $0x70] sm:$0xff]
    %v229 = vld [vmem:[#allocation8 + $0x78] sm:$0xff]
    %v230 = vld [vmem:[#allocation8 + $0x80] sm:$0xff]
    %v231 = vld [vmem:[#allocation8 + $0x88] sm:$0xff]
    %v232 = vld [vmem:[#allocation8 + $0x90] sm:$0xff]
    %v233 = vld [vmem:[#allocation8 + $0x98] sm:$0xff]
    %v234 = vld [vmem:[#allocation8 + $0xa0] sm:$0xff]
    %v235 = vld [vmem:[#allocation8 + $0xa8] sm:$0xff]
    %v236 = vld [vmem:[#allocation8 + $0xb0] sm:$0xff]
    %v237 = vld [vmem:[#allocation8 + $0xb8] sm:$0xff]
    %v238 = vld [vmem:[#allocation8 + $0xc0] sm:$0xff]
    %v239 = vld [vmem:[#allocation8 + $0xc8] sm:$0xff]
    %v240 = vld [vmem:[#allocation8 + $0xd0] sm:$0xff]
    %v241 = vld [vmem:[#allocation8 + $0xd8] sm:$0xff]
    %v242 = vld [vmem:[#allocation8 + $0xe0] sm:$0xff]
    %v243 = vld [vmem:[#allocation8 + $0xe8] sm:$0xff]
    %v244 = vld [vmem:[#allocation8 + $0xf0] sm:$0xff]
    %v245 = vld [vmem:[#allocation8 + $0xf8] sm:$0xff]
    %246 = vmatprep.subr.mxu0 %v245
    %247 = vmatpush1.msra.mxu0 %v244
    %248 = vmatprep.subr.mxu0 %v243
    %249 = vmatpush1.msra.mxu0 %v242
    %250 = vmatprep.subr.mxu0 %v241
    %251 = vmatpush1.msra.mxu0 %v240
    %252 = vmatprep.subr.mxu0 %v239
    %253 = vmatpush1.msra.mxu0 %v238
    %254 = vmatprep.subr.mxu0 %v237
    %255 = vmatpush1.msra.mxu0 %v236
    %256 = vmatprep.subr.mxu0 %v235
    %257 = vmatpush1.msra.mxu0 %v234
    %258 = vmatprep.subr.mxu0 %v233
    %259 = vmatpush1.msra.mxu0 %v232
    %260 = vmatprep.subr.mxu0 %v231
    %261 = vmatpush1.msra.mxu0 %v230
    %262 = vmatprep.subr.mxu0 %v229
    %263 = vmatpush1.msra.mxu0 %v228
    %264 = vmatprep.subr.mxu0 %v227
    %265 = vmatpush1.msra.mxu0 %v226
    %266 = vmatprep.subr.mxu0 %v225
    %267 = vmatpush1.msra.mxu0 %v224
    %268 = vmatprep.subr.mxu0 %v223
    %269 = vmatpush1.msra.mxu0 %v222
    %270 = vmatprep.subr.mxu0 %v221
    %271 = vmatpush1.msra.mxu0 %v220
    %272 = vmatprep.subr.mxu0 %v219
    %273 = vmatpush1.msra.mxu0 %v218
    %274 = vmatprep.subr.mxu0 %v217
    %275 = vmatpush1.msra.mxu0 %v216
    %276 = vmatprep.subr.mxu0 %v215
    %277 = vmatpush1.msra.mxu0 %v214
    %278 = vmatprep.subr.mxu0 0.0
    %279 = vmatpush2.msra.mxu0 0.0
    %280 = vmatprep.subr.mxu0 0.0
    %281 = vmatpush2.msra.mxu0 0.0
    %282 = vmatprep.subr.mxu0 0.0
    %283 = vmatpush2.msra.mxu0 0.0
    %284 = vmatprep.subr.mxu0 0.0
    %285 = vmatpush2.msra.mxu0 0.0
    %286 = vmatprep.subr.mxu0 0.0
    %287 = vmatpush2.msra.mxu0 0.0
    %288 = vmatprep.subr.mxu0 0.0
    %289 = vmatpush2.msra.mxu0 0.0
    %290 = vmatprep.subr.mxu0 0.0
    %291 = vmatpush2.msra.mxu0 0.0
    %292 = vmatprep.subr.mxu0 0.0
    %293 = vmatpush2.msra.mxu0 0.0
    %294 = vmatprep.subr.mxu0 0.0
    %295 = vmatpush2.msra.mxu0 0.0
    %296 = vmatprep.subr.mxu0 0.0
    %297 = vmatpush2.msra.mxu0 0.0
    %298 = vmatprep.subr.mxu0 0.0
    %299 = vmatpush2.msra.mxu0 0.0
    %300 = vmatprep.subr.mxu0 0.0
    %301 = vmatpush2.msra.mxu0 0.0
    %302 = vmatprep.subr.mxu0 0.0
    %303 = vmatpush2.msra.mxu0 0.0
    %304 = vmatprep.subr.mxu0 0.0
    %305 = vmatpush2.msra.mxu0 0.0
    %306 = vmatprep.subr.mxu0 0.0
    %307 = vmatpush2.msra.mxu0 0.0
    %308 = vmatprep.subr.mxu0 0.0
    %309 = vmatpush2.msra.mxu0 0.0
    %310 = vmatprep.mubr.f32.mxu0 0.0
    %311 = vmatmul.mubr.f32.gmra.mxu0 %v213
    %v312 = vpop.f32.mrf.mxu0
    %v313 = vadd.f32 0.0, %v312
    %v314 = vpop.f32.mrf.mxu0
    %v315 = vadd.f32 0.0, %v314
    %316 = vdwg.mxu0
    %v317 = vld [vmem:[%s5] sm:$0x3]
    %v318 = vld [vmem:[%s6] sm:$0x3]
    %v319 = vrot.slane %v313, 4
    %v320 = vadd.f32 %v313, %v319
    %v321 = vrot.slane %v320, 2
    %v322 = vadd.f32 %v320, %v321
    %v323 = vrot.slane %v322, 1
    %v324 = vadd.f32 %v322, %v323
    %v325 = vrot.slane %v315, 4
    %v326 = vadd.f32 %v315, %v325
    %v327 = vrot.slane %v326, 2
    %v328 = vadd.f32 %v326, %v327
    %v329 = vrot.slane %v328, 1
    %v330 = vadd.f32 %v328, %v329
    %v331 = vmul.f32 %v324, %v184
    %v332 = vmul.f32 %v330, %v184
    %v333 = vsub.f32 %v313, %v331
    %v334 = vsub.f32 %v315, %v332
    %v335 = vmul.f32 %v333, %v333
    %v336 = vmul.f32 %v334, %v334
    %v337 = vrot.slane %v335, 4
    %v338 = vadd.f32 %v335, %v337
    %v339 = vrot.slane %v338, 2
    %v340 = vadd.f32 %v338, %v339
    %v341 = vrot.slane %v340, 1
    %v342 = vadd.f32 %v340, %v341
    %v343 = vrot.slane %v336, 4
    %v344 = vadd.f32 %v336, %v343
    %v345 = vrot.slane %v344, 2
    %v346 = vadd.f32 %v344, %v345
    %v347 = vrot.slane %v346, 1
    %v348 = vadd.f32 %v346, %v347
    %v349 = vmul.f32 %v342, %v184
    %v350 = vmul.f32 %v348, %v184
    %v351 = vadd.f32 %v349, 1e-05
    %v352 = vadd.f32 %v350, 1e-05
    %v353 = vrsqrt.pop %v351
    %v354 = vrsqrt.pop %v352
    %v357 = vcombine.low %v353, %v354
    %v359 = vunpack.c.l.s4 1966171168
    %v360 = vunpack.c.0.s8 %v359
    %v361 = vlaneseq
    %v362 = vshrl.u32 %v361, 7
    %v363 = vsub.s32 %v360, %v362
    %v364 = vrot.slane %v357, %v363
    %v366 = vunpack.c.l.s4 1966171168
    %v367 = vunpack.c.0.s8 %v366
    %v368 = vlaneseq
    %v369 = vshrl.u32 %v368, 7
    %v370 = vsub.s32 %v367, %v369
    %v371 = vrot.slane %v364, %v370
    %v373 = vmul.f32 %v317, %v371
    %v375 = vlaneseq
    %v376 = vshrl.u32 %v375, 7
    %v377 = vsub.s32 0, %v376
    %v378 = vrot.slane %v373, %v377
    %v379 = vlaneseq
    %v380 = vshrl.u32 %v379, 7
    %v381 = vsub.s32 1, %v380
    %v382 = vrot.slane %v373, %v381
    %v385 = vmul.f32 %v331, %v378
    %v386 = vmul.f32 %v332, %v382
    %v389 = vcombine.low %v385, %v386
    %v391 = vunpack.c.l.s4 1966171168
    %v392 = vunpack.c.0.s8 %v391
    %v393 = vlaneseq
    %v394 = vshrl.u32 %v393, 7
    %v395 = vsub.s32 %v392, %v394
    %v396 = vrot.slane %v389, %v395
    %v398 = vunpack.c.l.s4 1966171168
    %v399 = vunpack.c.0.s8 %v398
    %v400 = vlaneseq
    %v401 = vshrl.u32 %v400, 7
    %v402 = vsub.s32 %v399, %v401
    %v403 = vrot.slane %v396, %v402
    %v405 = vsub.f32 %v318, %v403
    %v406 = vmul.f32 %v313, %v378
    %v407 = vmul.f32 %v315, %v382
    %v409 = vlaneseq
    %v410 = vshrl.u32 %v409, 7
    %v411 = vsub.s32 0, %v410
    %v412 = vrot.slane %v405, %v411
    %v413 = vlaneseq
    %v414 = vshrl.u32 %v413, 7
    %v415 = vsub.s32 1, %v414
    %v416 = vrot.slane %v405, %v415
    %v419 = vadd.f32 %v406, %v412
    %v420 = vadd.f32 %v407, %v416
    %v421 = vld [vmem:[#allocation10] sm:$0xff]
    %v422 = vld [vmem:[#allocation10 + $0x8] sm:$0xff]
    %v423 = vld [vmem:[#allocation10 + $0x10] sm:$0xff]
    %v424 = vld [vmem:[#allocation10 + $0x18] sm:$0xff]
    %v425 = vld [vmem:[#allocation10 + $0x20] sm:$0xff]
    %v426 = vld [vmem:[#allocation10 + $0x28] sm:$0xff]
    %v427 = vld [vmem:[#allocation10 + $0x30] sm:$0xff]
    %v428 = vld [vmem:[#allocation10 + $0x38] sm:$0xff]
    %v429 = vld [vmem:[#allocation10 + $0x40] sm:$0xff]
    %v430 = vld [vmem:[#allocation10 + $0x48] sm:$0xff]
    %v431 = vld [vmem:[#allocation10 + $0x50] sm:$0xff]
    %v432 = vld [vmem:[#allocation10 + $0x58] sm:$0xff]
    %v433 = vld [vmem:[#allocation10 + $0x60] sm:$0xff]
    %v434 = vld [vmem:[#allocation10 + $0x68] sm:$0xff]
    %v435 = vld [vmem:[#allocation10 + $0x70] sm:$0xff]
    %v436 = vld [vmem:[#allocation10 + $0x78] sm:$0xff]
    %v437 = vld [vmem:[#allocation10 + $0x80] sm:$0xff]
    %v438 = vld [vmem:[#allocation10 + $0x88] sm:$0xff]
    %v439 = vld [vmem:[#allocation10 + $0x90] sm:$0xff]
    %v440 = vld [vmem:[#allocation10 + $0x98] sm:$0xff]
    %v441 = vld [vmem:[#allocation10 + $0xa0] sm:$0xff]
    %v442 = vld [vmem:[#allocation10 + $0xa8] sm:$0xff]
    %v443 = vld [vmem:[#allocation10 + $0xb0] sm:$0xff]
    %v444 = vld [vmem:[#allocation10 + $0xb8] sm:$0xff]
    %v445 = vld [vmem:[#allocation10 + $0xc0] sm:$0xff]
    %v446 = vld [vmem:[#allocation10 + $0xc8] sm:$0xff]
    %v447 = vld [vmem:[#allocation10 + $0xd0] sm:$0xff]
    %v448 = vld [vmem:[#allocation10 + $0xd8] sm:$0xff]
    %v449 = vld [vmem:[#allocation10 + $0xe0] sm:$0xff]
    %v450 = vld [vmem:[#allocation10 + $0xe8] sm:$0xff]
    %v451 = vld [vmem:[#allocation10 + $0xf0] sm:$0xff]
    %v452 = vld [vmem:[#allocation10 + $0xf8] sm:$0xff]
    %v453 = vld [vmem:[%s8] sm:$0x1]
    %v455 = vlaneseq
    %v456 = vshrl.u32 %v455, 7
    %v457 = vsub.s32 0, %v456
    %v458 = vrot.slane %v453, %v457
    %460 = vmatprep.subr.mxu0 0.0
    %461 = vmatpush1.msra.mxu0 %v436
    %462 = vmatprep.subr.mxu0 0.0
    %463 = vmatpush1.msra.mxu0 %v435
    %464 = vmatprep.subr.mxu0 0.0
    %465 = vmatpush1.msra.mxu0 %v434
    %466 = vmatprep.subr.mxu0 0.0
    %467 = vmatpush1.msra.mxu0 %v433
    %468 = vmatprep.subr.mxu0 0.0
    %469 = vmatpush1.msra.mxu0 %v432
    %470 = vmatprep.subr.mxu0 0.0
    %471 = vmatpush1.msra.mxu0 %v431
    %472 = vmatprep.subr.mxu0 0.0
    %473 = vmatpush1.msra.mxu0 %v430
    %474 = vmatprep.subr.mxu0 0.0
    %475 = vmatpush1.msra.mxu0 %v429
    %476 = vmatprep.subr.mxu0 0.0
    %477 = vmatpush1.msra.mxu0 %v428
    %478 = vmatprep.subr.mxu0 0.0
    %479 = vmatpush1.msra.mxu0 %v427
    %480 = vmatprep.subr.mxu0 0.0
    %481 = vmatpush1.msra.mxu0 %v426
    %482 = vmatprep.subr.mxu0 0.0
    %483 = vmatpush1.msra.mxu0 %v425
    %484 = vmatprep.subr.mxu0 0.0
    %485 = vmatpush1.msra.mxu0 %v424
    %486 = vmatprep.subr.mxu0 0.0
    %487 = vmatpush1.msra.mxu0 %v423
    %488 = vmatprep.subr.mxu0 0.0
    %489 = vmatpush1.msra.mxu0 %v422
    %490 = vmatprep.subr.mxu0 0.0
    %491 = vmatpush1.msra.mxu0 %v421
    %492 = vmatprep.subr.mxu0 0.0
    %493 = vmatpush2.msra.mxu0 %v452
    %494 = vmatprep.subr.mxu0 0.0
    %495 = vmatpush2.msra.mxu0 %v451
    %496 = vmatprep.subr.mxu0 0.0
    %497 = vmatpush2.msra.mxu0 %v450
    %498 = vmatprep.subr.mxu0 0.0
    %499 = vmatpush2.msra.mxu0 %v449
    %500 = vmatprep.subr.mxu0 0.0
    %501 = vmatpush2.msra.mxu0 %v448
    %502 = vmatprep.subr.mxu0 0.0
    %503 = vmatpush2.msra.mxu0 %v447
    %504 = vmatprep.subr.mxu0 0.0
    %505 = vmatpush2.msra.mxu0 %v446
    %506 = vmatprep.subr.mxu0 0.0
    %507 = vmatpush2.msra.mxu0 %v445
    %508 = vmatprep.subr.mxu0 0.0
    %509 = vmatpush2.msra.mxu0 %v444
    %510 = vmatprep.subr.mxu0 0.0
    %511 = vmatpush2.msra.mxu0 %v443
    %512 = vmatprep.subr.mxu0 0.0
    %513 = vmatpush2.msra.mxu0 %v442
    %514 = vmatprep.subr.mxu0 0.0
    %515 = vmatpush2.msra.mxu0 %v441
    %516 = vmatprep.subr.mxu0 0.0
    %517 = vmatpush2.msra.mxu0 %v440
    %518 = vmatprep.subr.mxu0 0.0
    %519 = vmatpush2.msra.mxu0 %v439
    %520 = vmatprep.subr.mxu0 0.0
    %521 = vmatpush2.msra.mxu0 %v438
    %522 = vmatprep.subr.mxu0 0.0
    %523 = vmatpush2.msra.mxu0 %v437
    %524 = vmatprep.mubr.f32.mxu0 %v420
    %525 = vmatmul.mubr.f32.gmra.mxu0 %v419
    %v526 = vpop.f32.mrf.mxu0
    %v527 = vadd.f32 %v458, %v526
    %v528 = vpop.f32.mrf.mxu0
    %529 = vdwg.mxu0
    %530 = vst [vmem:[#allocation11] sm:$0xff] %v527
    // Predicated region
    $region58: #{tpu_custom_call.1} parent=1 // pred_check
      _
    $region59: #{tpu_custom_call.1} parent=1 // pred_check_branch
      %532 = sbr.rel (0) target = $region61
    $region60: #{tpu_custom_call.1} parent=1 // pred_region
      %s534 = ssub.s32 128, 128
      %535 = vsyncadd [#allocation4], %s534
      %s537 = sshll.u32 [#allocation11], 4
      %s538 = int_to_ptr.vmem [resolvable:$true] %s537
      %540 = dma.vmem_to_hbm [thread:$0]  %s538, 128, %s9, [#allocation4]
    $region61: #{tpu_custom_call.1} parent=1 // pred_fallthru
      _
    // Predicated region
    $region62: #{tpu_custom_call.1} parent=1 // pred_check
      _
    $region63: #{tpu_custom_call.1} parent=1 // pred_check_branch
      %542 = sbr.rel (0) target = $region65
    $region64: #{tpu_custom_call.1} parent=1 // pred_region
      %543 = dma.done [#allocation4], 128
    $region65: #{tpu_custom_call.1} parent=1 // pred_fallthru
      _
    %544 = vsyncpa [#allocation3], 1
    %545 = vsyncpa [#allocation6], 1
    %546 = vsyncpa [#allocation9], 1
    %547 = vsyncpa [#allocation4], 1

</llo_original>
